<compile_context>
chip_gen: v6e
topology: v6e:2x2x1
jax: 0.10.0
libtpu: 0.0.40
codegen_flags: <defaults>
</compile_context>

<pallas_src>
import jax
import jax.numpy as jnp
from jax.experimental import pallas as pl
from jax.experimental.pallas import tpu as pltpu


def _round_up(x, m):
    return ((x + m - 1) // m) * m


def _lm_criterion_kernel(inp_ref, tgt_ref, mask_ref, num_ref, den_ref):
    """One (row_tile, vocab_tile) tile of the masked-NLL reduction.

    grid = (num_row_blocks, num_vocab_blocks). num_ref/den_ref blocks are resident
    across the vocab (reduction) axis and accumulated into.
    """
    k = pl.program_id(1)                      # vocab-block index (innermost / reduction)
    vocab_tile = inp_ref.shape[1]

    mask = mask_ref[...].astype(jnp.float32)  # (TR, 1)

    @pl.when(k == 0)
    def _init():
        num_ref[...] = jnp.zeros_like(num_ref)
        # Sum the mask only once per row block (not once per vocab chunk).
        den_ref[...] = jnp.zeros_like(den_ref) + jnp.sum(mask)

    inp = inp_ref[...]                        # (TR, TV) native dtype (f32 or bf16)
    tgt = tgt_ref[...]                        # (TR, 1)  int32

    # gather(2, target) restricted to this vocab chunk: compare against *global* vocab ids
    # (iota offset by the block start), select with jnp.where (no f32 one-hot temporary).
    vocab_ids = jax.lax.broadcasted_iota(jnp.int32, inp.shape, 1) + k * vocab_tile
    eq = vocab_ids == tgt                                               # (TR, TV) bool
    sel = jnp.where(eq, inp, jnp.zeros((), inp.dtype))                  # (TR, TV)
    gathered = jnp.sum(sel.astype(jnp.float32), axis=1, keepdims=True)  # (TR, 1) f32

    tile_num = jnp.sum(-gathered * mask)      # scalar partial numerator for this tile
    num_ref[...] = num_ref[...] + tile_num


def language_model_criterion(inp, target, mask, *, row_tile=None, vocab_tile=None):
    """inp: (B, T, V) log-probs (f32 or bf16); target: (B, T') int; mask: (B, T') float."""
    B, T, V = inp.shape
    # Glue from the PyTorch forward: truncate target/mask to input's time extent.
    target = target[:, :T].astype(jnp.int32)
    mask = mask[:, :T].astype(jnp.float32)

    R = B * T
    inp2 = inp.reshape(R, V)                  # keep native dtype — no wrapper f32 upcast
    tgt2 = target.reshape(R, 1)
    mask2 = mask.reshape(R, 1)

    # Tile sizes: multiples of (8, 128); defaults sized so double-buffered f32 input tiles
    # stay well under the scoped-VMEM limits on every generation (incl. v7x's 64 MiB VMEM).
    if row_tile is None:
        row_tile = min(256, _round_up(R, 8))
    if vocab_tile is None:
        vocab_tile = min(2048, _round_up(V, 128))
    row_tile = _round_up(row_tile, 8)
    vocab_tile = _round_up(vocab_tile, 128)

    Rp = _round_up(R, row_tile)
    Vp = _round_up(V, vocab_tile)
    if Rp != R:
        pr = Rp - R
        inp2 = jnp.pad(inp2, ((0, pr), (0, 0)))
        tgt2 = jnp.pad(tgt2, ((0, pr), (0, 0)))   # padded rows: mask 0 -> 0 contribution
        mask2 = jnp.pad(mask2, ((0, pr), (0, 0)))
    if Vp != V:
        # Padded vocab columns get ids >= V which never match a valid target -> 0 contrib.
        inp2 = jnp.pad(inp2, ((0, 0), (0, Vp - V)))

    nr = Rp // row_tile
    nk = Vp // vocab_tile

    num_part, den_part = pl.pallas_call(
        _lm_criterion_kernel,
        out_shape=(
            jax.ShapeDtypeStruct((nr, 1, 1), jnp.float32),
            jax.ShapeDtypeStruct((nr, 1, 1), jnp.float32),
        ),
        grid_spec=pltpu.PrefetchScalarGridSpec(
            num_scalar_prefetch=0,
            grid=(nr, nk),                                              # reduction axis last
            in_specs=[
                pl.BlockSpec((row_tile, vocab_tile), lambda r, k: (r, k)),  # input tiles
                pl.BlockSpec((row_tile, 1), lambda r, k: (r, 0)),           # target (resident over k)
                pl.BlockSpec((row_tile, 1), lambda r, k: (r, 0)),           # mask   (resident over k)
            ],
            out_specs=(
                pl.BlockSpec((1, 1, 1), lambda r, k: (r, 0, 0)),            # partial numerator
                pl.BlockSpec((1, 1, 1), lambda r, k: (r, 0, 0)),            # partial denominator
            ),
        ),
        compiler_params=pltpu.CompilerParams(
            dimension_semantics=("parallel", "arbitrary")),
    )(inp2, tgt2, mask2)

    # Tiny finalize: (nr,) sums + one divide.
    # TODO(synk): division by sum(mask) is unguarded (NaN for an all-zero mask), matching the
    # PyTorch reference semantics.
    return jnp.sum(num_part) / jnp.sum(den_part)


def _reference(inp, target, mask):
    T = inp.shape[1]
    target = target[:, :T]
    mask = mask[:, :T].astype(jnp.float32)
    gathered = jnp.take_along_axis(inp, target[:, :, None], axis=2)[:, :, 0]
    return jnp.sum(-gathered * mask) / jnp.sum(mask)


if __name__ == "__main__":
    # Test 1: small shapes, target/mask longer than input T (exercises truncation + padding).
    key = jax.random.PRNGKey(0)
    B, T, T_full, V = 2, 8, 10, 32
    k1, k2, _ = jax.random.split(key, 3)
    logits = jax.random.normal(k1, (B, T, V), dtype=jnp.float32)
    log_probs = jax.nn.log_softmax(logits, axis=-1)
    target = jax.random.randint(k2, (B, T_full), 0, V, dtype=jnp.int32)
    lengths = jnp.array([6, 9], dtype=jnp.int32)
    mask = (jnp.arange(T_full)[None, :] < lengths[:, None]).astype(jnp.float32)

    loss = jax.block_until_ready(language_model_criterion(log_probs, target, mask))
    ref = _reference(log_probs, target, mask)
    assert jnp.allclose(loss, ref, rtol=1e-5, atol=1e-5), (loss, ref)

    # Test 2: multi-block grid on both axes (row + vocab padding, iota offset exercised).
    B2, T2, T2_full, V2 = 3, 21, 24, 300       # rows=63 -> pad to 64; V=300 -> pad to 384
    k3, k4, k5 = jax.random.split(jax.random.PRNGKey(1), 3)
    lp2 = jax.nn.log_softmax(jax.random.normal(k3, (B2, T2, V2), jnp.float32), axis=-1)
    tgt2 = jax.random.randint(k4, (B2, T2_full), 0, V2, dtype=jnp.int32)
    msk2 = (jax.random.uniform(k5, (B2, T2_full)) > 0.3).astype(jnp.float32)
    msk2 = msk2.at[:, 0].set(1.0)              # guarantee a non-zero mask
    loss2 = jax.block_until_ready(
        language_model_criterion(lp2, tgt2, msk2, row_tile=16, vocab_tile=128))
    ref2 = _reference(lp2, tgt2, msk2)
    assert jnp.allclose(loss2, ref2, rtol=1e-5, atol=1e-5), (loss2, ref2)

    print("KERNEL_OK")
</pallas_src>

<mosaic_0001>
module attributes {stable_mosaic.version = 11 : i64} {
  func.func @_lm_criterion_kernel(%arg0: i32, %arg1: i32, %arg2: memref<16x128xf32, #tpu.memory_space<vmem>>, %arg3: memref<16x1xi32, #tpu.memory_space<vmem>>, %arg4: memref<16x1xf32, #tpu.memory_space<vmem>>, %arg5: memref<1x1x1xf32, #tpu.memory_space<vmem>>, %arg6: memref<1x1x1xf32, #tpu.memory_space<vmem>>) attributes {dimension_semantics = [#tpu.dimension_semantics<parallel>, #tpu.dimension_semantics<arbitrary>], iteration_bounds = array<i64: 1, 1>, scalar_prefetch = 0 : i64, scratch_operands = 0 : i64, tpu.core_type = #tpu.core_type<tc>, window_params = [{transform_indices = @transform_0, window_bounds = array<i64: 16, 128>}, {transform_indices = @transform_1, window_bounds = array<i64: 16, 1>}, {transform_indices = @transform_2, window_bounds = array<i64: 16, 1>}, {transform_indices = @transform_3, window_bounds = array<i64: 1, 1, 1>}, {transform_indices = @transform_4, window_bounds = array<i64: 1, 1, 1>}]} {
    %c0 = arith.constant 0 : index
    %c0_0 = arith.constant 0 : index
    %0 = vector.load %arg4[%c0, %c0_0] : memref<16x1xf32, #tpu.memory_space<vmem>>, vector<16x1xf32>
    %c0_i32 = arith.constant 0 : i32
    %1 = arith.cmpi eq, %arg1, %c0_i32 : i32
    %2 = arith.extui %1 : i1 to i32
    %c0_i32_1 = arith.constant 0 : i32
    %3 = arith.cmpi ne, %2, %c0_i32_1 : i32
    scf.if %3 {
      %cst_15 = arith.constant 0.000000e+00 : f32
      %27 = vector.broadcast %cst_15 : f32 to vector<1x1x1xf32>
      %c0_16 = arith.constant 0 : index
      %c0_17 = arith.constant 0 : index
      %c0_18 = arith.constant 0 : index
      %28 = vector.load %arg5[%c0_16, %c0_17, %c0_18] : memref<1x1x1xf32, #tpu.memory_space<vmem>>, vector<1x1x1xf32>
      tpu.vector_store %arg5[%c0_16, %c0_17, %c0_18], %27 {strides = array<i32>} : memref<1x1x1xf32, #tpu.memory_space<vmem>>, vector<1x1x1xf32>,
      %cst_19 = arith.constant 0.000000e+00 : f32
      %29 = vector.broadcast %cst_19 : f32 to vector<1x1x1xf32>
      %30 = vector.shape_cast %0 : vector<16x1xf32> to vector<1x16x1xf32>
      %cst_20 = arith.constant dense<0.000000e+00> : vector<1xf32>
      %31 = vector.multi_reduction <add>, %30, %cst_20 [1, 2] : vector<1x16x1xf32> to vector<1xf32>
      %32 = vector.shape_cast %31 : vector<1xf32> to vector<1x1x1xf32>
      %33 = vector.extract %32[0, 0, 0] : f32 from vector<1x1x1xf32>
      %34 = vector.broadcast %33 : f32 to vector<1x1x1xf32>
      %35 = arith.addf %29, %34 : vector<1x1x1xf32>
      %c0_21 = arith.constant 0 : index
      %c0_22 = arith.constant 0 : index
      %c0_23 = arith.constant 0 : index
      %36 = vector.load %arg6[%c0_21, %c0_22, %c0_23] : memref<1x1x1xf32, #tpu.memory_space<vmem>>, vector<1x1x1xf32>
      tpu.vector_store %arg6[%c0_21, %c0_22, %c0_23], %35 {strides = array<i32>} : memref<1x1x1xf32, #tpu.memory_space<vmem>>, vector<1x1x1xf32>,
    } else {
    }
    %c0_2 = arith.constant 0 : index
    %c0_3 = arith.constant 0 : index
    %4 = vector.load %arg2[%c0_2, %c0_3] : memref<16x128xf32, #tpu.memory_space<vmem>>, vector<16x128xf32>
    %c0_4 = arith.constant 0 : index
    %c0_5 = arith.constant 0 : index
    %5 = vector.load %arg3[%c0_4, %c0_5] : memref<16x1xi32, #tpu.memory_space<vmem>>, vector<16x1xi32>
    %6 = tpu.iota {dimensions = array<i32: 1>} : vector<16x128xi32>
    %c128_i32 = arith.constant 128 : i32
    %7 = arith.muli %arg1, %c128_i32 : i32
    %8 = vector.broadcast %7 : i32 to vector<16x128xi32>
    %9 = arith.addi %6, %8 : vector<16x128xi32>
    %10 = vector.broadcast %5 : vector<16x1xi32> to vector<16x128xi32>
    %11 = arith.cmpi eq, %9, %10 : vector<16x128xi32>
    %cst = arith.constant 0.000000e+00 : f32
    %12 = vector.broadcast %cst : f32 to vector<16x128xf32>
    %13 = arith.select %11, %4, %12 : vector<16x128xi1>, vector<16x128xf32>
    %cst_6 = arith.constant dense<0.000000e+00> : vector<16xf32>
    %14 = vector.multi_reduction <add>, %13, %cst_6 [1] : vector<16x128xf32> to vector<16xf32>
    %15 = vector.shape_cast %14 : vector<16xf32> to vector<16x1xf32>
    %cst_7 = arith.constant 0.000000e+00 : f32
    %16 = vector.broadcast %cst_7 : f32 to vector<16x1xf32>
    %17 = arith.subf %16, %15 : vector<16x1xf32>
    %18 = arith.mulf %17, %0 : vector<16x1xf32>
    %19 = vector.shape_cast %18 : vector<16x1xf32> to vector<1x16x1xf32>
    %cst_8 = arith.constant dense<0.000000e+00> : vector<1xf32>
    %20 = vector.multi_reduction <add>, %19, %cst_8 [1, 2] : vector<1x16x1xf32> to vector<1xf32>
    %21 = vector.shape_cast %20 : vector<1xf32> to vector<1x1x1xf32>
    %22 = vector.extract %21[0, 0, 0] : f32 from vector<1x1x1xf32>
    %c0_9 = arith.constant 0 : index
    %c0_10 = arith.constant 0 : index
    %c0_11 = arith.constant 0 : index
    %23 = vector.load %arg5[%c0_9, %c0_10, %c0_11] : memref<1x1x1xf32, #tpu.memory_space<vmem>>, vector<1x1x1xf32>
    %24 = vector.broadcast %22 : f32 to vector<1x1x1xf32>
    %25 = arith.addf %23, %24 : vector<1x1x1xf32>
    %c0_12 = arith.constant 0 : index
    %c0_13 = arith.constant 0 : index
    %c0_14 = arith.constant 0 : index
    %26 = vector.load %arg5[%c0_12, %c0_13, %c0_14] : memref<1x1x1xf32, #tpu.memory_space<vmem>>, vector<1x1x1xf32>
    tpu.vector_store %arg5[%c0_12, %c0_13, %c0_14], %25 {strides = array<i32>} : memref<1x1x1xf32, #tpu.memory_space<vmem>>, vector<1x1x1xf32>,
    return
  }
  func.func @transform_0(%arg0: i32, %arg1: i32) -> (i32, i32) {
    %c0_i32 = arith.constant 0 : i32
    return %arg0, %arg1 : i32, i32
  }
  func.func @transform_1(%arg0: i32, %arg1: i32) -> (i32, i32) {
    %c0_i32 = arith.constant 0 : i32
    %c0_i32_0 = arith.constant 0 : i32
    return %arg0, %c0_i32 : i32, i32
  }
  func.func @transform_2(%arg0: i32, %arg1: i32) -> (i32, i32) {
    %c0_i32 = arith.constant 0 : i32
    %c0_i32_0 = arith.constant 0 : i32
    return %arg0, %c0_i32 : i32, i32
  }
  func.func @transform_3(%arg0: i32, %arg1: i32) -> (i32, i32, i32) {
    %c0_i32 = arith.constant 0 : i32
    %c0_i32_0 = arith.constant 0 : i32
    %c0_i32_1 = arith.constant 0 : i32
    return %arg0, %c0_i32, %c0_i32_0 : i32, i32, i32
  }
  func.func @transform_4(%arg0: i32, %arg1: i32) -> (i32, i32, i32) {
    %c0_i32 = arith.constant 0 : i32
    %c0_i32_0 = arith.constant 0 : i32
    %c0_i32_1 = arith.constant 0 : i32
    return %arg0, %c0_i32, %c0_i32_0 : i32, i32, i32
  }
}

</mosaic_0001>

<llo_original>
// kernel: tpu_custom_call.1
$region0: #{tpu_custom_call.1}
  #allocation0 [shape = 'u32[]', space=smem, size = 0x4, offset = 0x4, fixed_abs, tag = 'smem constant byte address 0x4 - core index']
  #allocation1 [shape = 'u32[144,128]{1,0:T(1,128)}', space=vmem, size = 0x12000, scoped, tag = 'internal scratch']
  %s0 = inlined_call_operand.vmem [shape: f32[16,128], index: 0, kind: input, shape index: {}]
  %s1 = inlined_call_operand.vmem [shape: s32[16,1], index: 1, kind: input, shape index: {}]
  %s2 = inlined_call_operand.vmem [shape: f32[16,1], index: 2, kind: input, shape index: {}]
  %s3 = inlined_call_operand.hbm [shape: f32[1,1,1], index: 3, kind: output, shape index: {0}]
  %s4 = inlined_call_operand.hbm [shape: f32[1,1,1], index: 4, kind: output, shape index: {1}]
  %5 = xla_tuple %s3, %s4
  %s6 = sld [smem:[#allocation0]]
  $region34: #{tpu_custom_call.1} parent=0
    _
  %s8 = ssub.s32 1, %s6
  %s9 = scalar_select 0, %s8, %s6
  $region1: #{tpu_custom_call.1} parent=0
    #allocation2 [shape = 'u8[512]{0}', space=vmem, size = 0x400, scoped, tag = 'output window, operand 0, single buffered']
    #allocation3 [shape = 's32[1]{0}', space=sflag, size = 0x4, scoped, tag = 'scoped memory for tpu_custom_call.1']
    #allocation4 [shape = 'u8[512]{0}', space=vmem, size = 0x400, scoped, tag = 'output window, operand 1, single buffered']
    #allocation5 [shape = 's32[1]{0}', space=sflag, size = 0x4, scoped, tag = 'scoped memory for tpu_custom_call.1']
    %10 = vsyncpa [#allocation3], 0
    %11 = vsyncpa [#allocation5], 0
    // Predicated region
    $region2: #{tpu_custom_call.1} parent=1 // pred_check
      _
    $region3: #{tpu_custom_call.1} parent=1 // pred_check_branch
      %13 = sbr.rel (0) target = $region5
    $region4: #{tpu_custom_call.1} parent=1 // pred_region
      _
    $region5: #{tpu_custom_call.1} parent=1 // pred_fallthru
      _
    // Predicated region
    $region6: #{tpu_custom_call.1} parent=1 // pred_check
      _
    $region7: #{tpu_custom_call.1} parent=1 // pred_check_branch
      %15 = sbr.rel (0) target = $region9
    $region8: #{tpu_custom_call.1} parent=1 // pred_region
      _
    $region9: #{tpu_custom_call.1} parent=1 // pred_fallthru
      _
    // Predicated region
    $region10: #{tpu_custom_call.1} parent=1 // pred_check
      _
    $region11: #{tpu_custom_call.1} parent=1 // pred_check_branch
      %17 = sbr.rel (0) target = $region13
    $region12: #{tpu_custom_call.1} parent=1 // pred_region
      _
    $region13: #{tpu_custom_call.1} parent=1 // pred_fallthru
      _
    %v18 = vld [vmem:[%s2] sm:$0xff]
    %v19 = vld [vmem:[%s2 + $0x8] sm:$0xff]
    %p20 = scmp.eq.s32.totalorder 0, 0
    // Predicated region
    $region14: #{tpu_custom_call.1} parent=1 // pred_check
      %p21 = pneg %p20
    $region15: #{tpu_custom_call.1} parent=1 // pred_check_branch
      %23 = sbr.rel (%p21) target = $region17
    $region16: #{tpu_custom_call.1} parent=1 // pred_region
      %vm24 = vcmask 0
      %25 = vst.msk [vmem:[#allocation2] sm:$0x1] %vm24, 0.0
      %vm26 = vcmask 7168
      %v27 = vsel %vm26, %v18, 0.0
      %v28 = vsel %vm26, %v19, 0.0
      %v29 = vadd.f32 %v27, %v28
      %30 = vadd.xlane.f32.xlu0 %v29
      %v31 = vpop.xlane.xlu0 %30
      %v32 = vrot.slane %v31, 4
      %v33 = vadd.f32 %v31, %v32
      %v34 = vrot.slane %v33, 2
      %v35 = vadd.f32 %v33, %v34
      %v36 = vrot.slane %v35, 1
      %v37 = vadd.f32 %v35, %v36
      %s38 = vtos %v37
      %v39 = vstv %s38
      %v40 = vadd.f32 %v39, 0.0
      %41 = vst.msk [vmem:[#allocation4] sm:$0x1] %vm24, %v40
    $region17: #{tpu_custom_call.1} parent=1 // pred_fallthru
      _
    %v42 = vld [vmem:[%s0] sm:$0xff]
    %v43 = vld [vmem:[%s0 + $0x8] sm:$0xff]
    %v44 = vld [vmem:[%s1] sm:$0xff]
    %v45 = vld [vmem:[%s1 + $0x8] sm:$0xff]
    %v46 = vlaneseq
    %v47 = vand.u32 %v46, 127
    %s48 = smul.u32 0, 128
    %v49 = vstv %s48
    %v50 = vadd.s32 %v47, %v49
    %51 = vset.pattern.permute.xlu0 0
    %52 = vperm.xlu0 %51, %v44
    %v53 = vpop.permute.xlu0 %52
    %54 = vset.pattern.permute.xlu0 0
    %55 = vperm.xlu0 %54, %v45
    %v56 = vpop.permute.xlu0 %55
    %vm57 = vcmp.eq.s32.totalorder %v50, %v53
    %vm58 = vcmp.eq.s32.totalorder %v50, %v56
    %v59 = vsel %vm57, %v42, 0.0
    %v60 = vsel %vm58, %v43, 0.0
    %61 = vadd.xlane.f32.xlu0 %v59
    %v62 = vpop.xlane.xlu0 %61
    %63 = vadd.xlane.f32.xlu0 %v60
    %v64 = vpop.xlane.xlu0 %63
    %v65 = vsub.f32 0.0, %v62
    %v66 = vsub.f32 0.0, %v64
    %v67 = vmul.f32 %v65, %v18
    %v68 = vmul.f32 %v66, %v19
    %vm69 = vcmask 7168
    %v70 = vsel %vm69, %v67, 0.0
    %v71 = vsel %vm69, %v68, 0.0
    %v72 = vadd.f32 %v70, %v71
    %73 = vadd.xlane.f32.xlu0 %v72
    %v74 = vpop.xlane.xlu0 %73
    %v75 = vrot.slane %v74, 4
    %v76 = vadd.f32 %v74, %v75
    %v77 = vrot.slane %v76, 2
    %v78 = vadd.f32 %v76, %v77
    %v79 = vrot.slane %v78, 1
    %v80 = vadd.f32 %v78, %v79
    %s81 = vtos %v80
    %v82 = vld [vmem:[#allocation2] sm:$0x1]
    %v83 = vstv %s81
    %v84 = vadd.f32 %v82, %v83
    %vm85 = vcmask 0
    %86 = vst.msk [vmem:[#allocation2] sm:$0x1] %vm85, %v84
    // Predicated region
    $region18: #{tpu_custom_call.1} parent=1 // pred_check
      _
    $region19: #{tpu_custom_call.1} parent=1 // pred_check_branch
      %88 = sbr.rel (0) target = $region21
    $region20: #{tpu_custom_call.1} parent=1 // pred_region
      %s90 = ssub.s32 16, 16
      %91 = vsyncadd [#allocation3], %s90
      %s93 = sshll.u32 [#allocation2], 4
      %s94 = int_to_ptr.vmem [resolvable:$true] %s93
      %96 = dma.vmem_to_hbm [thread:$0]  %s94, 16, %s3, [#allocation3]
    $region21: #{tpu_custom_call.1} parent=1 // pred_fallthru
      _
    // Predicated region
    $region22: #{tpu_custom_call.1} parent=1 // pred_check
      _
    $region23: #{tpu_custom_call.1} parent=1 // pred_check_branch
      %98 = sbr.rel (0) target = $region25
    $region24: #{tpu_custom_call.1} parent=1 // pred_region
      %s100 = ssub.s32 16, 16
      %101 = vsyncadd [#allocation5], %s100
      %s103 = sshll.u32 [#allocation4], 4
      %s104 = int_to_ptr.vmem [resolvable:$true] %s103
      %106 = dma.vmem_to_hbm [thread:$0]  %s104, 16, %s4, [#allocation5]
    $region25: #{tpu_custom_call.1} parent=1 // pred_fallthru
      _
    // Predicated region
    $region26: #{tpu_custom_call.1} parent=1 // pred_check
      _
    $region27: #{tpu_custom_call.1} parent=1 // pred_check_branch
      %108 = sbr.rel (0) target = $region29
    $region28: #{tpu_custom_call.1} parent=1 // pred_region
      %109 = dma.done [#allocation3], 16
    $region29: #{tpu_custom_call.1} parent=1 // pred_fallthru
      _
    // Predicated region
    $region30: #{tpu_custom_call.1} parent=1 // pred_check
      _
    $region31: #{tpu_custom_call.1} parent=1 // pred_check_branch
      %111 = sbr.rel (0) target = $region33
    $region32: #{tpu_custom_call.1} parent=1 // pred_region
      %112 = dma.done [#allocation5], 16
    $region33: #{tpu_custom_call.1} parent=1 // pred_fallthru
      _
    %113 = vsyncpa [#allocation3], 1
    %114 = vsyncpa [#allocation5], 1

</llo_original>
